<compile_context>
chip_gen: v7x
topology: tpu7x:2x2x1
jax: 0.10.0
libtpu: 0.0.40
codegen_flags: <defaults>
</compile_context>

<pallas_src>
import functools

import numpy as np
import jax
import jax.numpy as jnp
from jax import lax
from jax.experimental import pallas as pl
from jax.experimental.pallas import tpu as pltpu

# ----------------------------- config constants ------------------------------
NUM_GROUPS = 4
GNORM = True                     # reference default: GroupNorm norm layer
NUM_CHANNELS = [8, 16]           # channels of the two MDEQ branches
OUTPUT_CHANNELS = 8
GN_EPS = 1e-5


# ------------------------- host-side constant builders ------------------------
def _linear_interp_matrix(out_size, in_size):
    """1-D linear interpolation matrix, align_corners=True (PyTorch bilinear factor)."""
    if in_size == 1:
        return np.ones((out_size, 1), np.float32)
    if out_size == 1:
        m = np.zeros((1, in_size), np.float32)
        m[0, 0] = 1.0
        return m
    src = np.arange(out_size, dtype=np.float64) * (in_size - 1) / (out_size - 1)
    lo = np.clip(np.floor(src).astype(np.int64), 0, in_size - 1)
    hi = np.minimum(lo + 1, in_size - 1)
    frac = src - lo
    m = np.zeros((out_size, in_size), np.float64)
    m[np.arange(out_size), lo] += 1.0 - frac
    m[np.arange(out_size), hi] += frac
    return m.astype(np.float32)


def _bilinear_matrix_t(h_out, w_out, h_in, w_in):
    """Bt (h_in*w_in, h_out*w_out) so that up_flat = y_flat @ Bt (align_corners=True)."""
    uh = _linear_interp_matrix(h_out, h_in)          # (h_out, h_in)
    uw = _linear_interp_matrix(w_out, w_in)          # (w_out, w_in)
    b = np.einsum('ih,jw->ijhw', uh, uw).reshape(h_out * w_out, h_in * w_in)
    return np.ascontiguousarray(b.T, dtype=np.float32)


def _bilinear_matrix_t_blockdiag(h_out, w_out, h_in, w_in, num_samples):
    """Block-diagonal Bt for the batch-stacked (C, N*HW) lane layout."""
    bt = _bilinear_matrix_t(h_out, w_out, h_in, w_in)
    return np.kron(np.eye(num_samples, dtype=np.float32), bt)


def _conv3x3_masks_stacked(h, w, num_samples):
    """(8, N*h*w) validity masks for the 8 non-center 3x3 taps (zero padding at the
    image border). These also exactly zero any cross-sample wraparound of the rolls."""
    hh, ww = np.divmod(np.arange(h * w), w)
    rows = []
    for dy in (-1, 0, 1):
        for dx in (-1, 0, 1):
            if dy == 0 and dx == 0:
                continue
            valid = ((hh + dy >= 0) & (hh + dy < h)
                     & (ww + dx >= 0) & (ww + dx < w)).astype(np.float32)
            rows.append(np.tile(valid, num_samples))
    return np.stack(rows, axis=0)


def _group_mean_matrix(ccat, num_groups):
    """(Ccat, Ccat) matrix averaging each channel's row over its GroupNorm group."""
    cpg = ccat // num_groups
    gid = np.arange(ccat) // cpg
    return (gid[:, None] == gid[None, :]).astype(np.float32) / float(cpg)


# --------------------- roll probe (dtype support + direction) ------------------
def _probe_roll(dtype):
    """Compile & run a one-roll kernel in `dtype`; return pltpu.roll's sign convention.
    Raises if the roll cannot be lowered (or misbehaves) for this dtype."""
    length = 256

    def kernel(x_ref, o_ref):
        o_ref[...] = pltpu.roll(x_ref[...], shift=1, axis=1)

    x = jnp.broadcast_to(jnp.arange(length, dtype=jnp.float32)[None, :],
                         (8, length)).astype(dtype)
    out = pl.pallas_call(kernel, out_shape=jax.ShapeDtypeStruct((8, length), dtype))(x)
    v = int(float(jax.device_get(out)[0, 0]))
    if v == length - 1:
        return -1          # jnp.roll convention: out[i] = x[i - shift]
    if v == 1:
        return +1          # inverted convention: out[i] = x[i + shift]
    raise RuntimeError(f"unexpected pltpu.roll behaviour (probe value {v})")


def _choose_tap_dtype_and_dirsign():
    """bf16 roll/mask tap path on chips with a bf16 VPU (v6e/v7x); f32 otherwise (v5e).
    Falls back to f32 if a bf16 roll fails to lower or misbehaves."""
    prefer_bf16 = False
    try:
        kind = jax.devices()[0].device_kind.lower()
        prefer_bf16 = ("v6" in kind) or ("v7" in kind)
    except Exception:
        pass
    if prefer_bf16:
        try:
            return jnp.bfloat16, _probe_roll(jnp.bfloat16)
        except Exception:
            pass
    return jnp.float32, _probe_roll(jnp.float32)


# ------------------------------ fused Pallas kernel ---------------------------
def _fused_kernel(y0_ref, y1_ref, bt_ref, w1a_ref, w1b_ref, b1_ref,
                  gamma_ref, beta_ref, gmean_ref, w2_ref, b2_ref, mask_ref,
                  out_ref, *, num_samples, hw, eps, shifts, tap_dtype):
    y0 = y0_ref[...]                                   # (C0, N*HW)      f32
    y1 = y1_ref[...]                                   # (C1, N*h1*w1)   f32

    # --- bilinear upsample (align_corners=True) via block-diagonal interp matrix ---
    up = jnp.dot(y1, bt_ref[...], preferred_element_type=jnp.float32)        # (C1, NHW)

    # --- 1x1 conv without concat (f32 on purpose: feeds GroupNorm) ---
    z = (jnp.dot(w1a_ref[...], y0, preferred_element_type=jnp.float32)
         + jnp.dot(w1b_ref[...], up, preferred_element_type=jnp.float32)
         + b1_ref[...])                                                       # (Ccat, NHW)

    # --- GroupNorm (one-pass E[x] / E[x^2]) + affine + ReLU, per sample segment ---
    gmean = gmean_ref[...]                                                    # (Ccat, Ccat)
    meanmap = jnp.dot(gmean, z, preferred_element_type=jnp.float32)           # group-avg over channels
    sqmap = jnp.dot(gmean, z * z, preferred_element_type=jnp.float32)
    gamma = gamma_ref[...]
    beta = beta_ref[...]
    inv_hw = 1.0 / float(hw)
    segs = []
    for s in range(num_samples):
        sl = slice(s * hw, (s + 1) * hw)               # static, 128-aligned lane slice
        mean = jnp.sum(meanmap[:, sl], axis=1, keepdims=True) * inv_hw        # (Ccat, 1)
        msq = jnp.sum(sqmap[:, sl], axis=1, keepdims=True) * inv_hw
        var = jnp.maximum(msq - mean * mean, 0.0)
        scale = lax.rsqrt(var + eps) * gamma
        a_s = jnp.maximum((z[:, sl] - mean) * scale + beta, 0.0)
        segs.append(a_s.astype(tap_dtype))
    a = segs[0] if num_samples == 1 else jnp.concatenate(segs, axis=1)        # (Ccat, NHW)

    # --- 3x3 conv (pad=1): 9 rolled+masked taps, per-tap weights accumulated on MXU ---
    masks = mask_ref[...]                              # (8, NHW), tap dtype (no center)
    acc = None
    mi = 0
    for k, sft in enumerate(shifts):
        if k == 4:                                     # center tap: no roll, no mask
            tap = a
        else:
            tap = pltpu.roll(a, shift=sft, axis=1) * masks[mi:mi + 1, :]
            mi += 1
        contrib = jnp.dot(w2_ref[k], tap.astype(jnp.bfloat16),
                          preferred_element_type=jnp.float32)                 # (Cout, NHW)
        acc = contrib if acc is None else acc + contrib
    out_ref[...] = acc + b2_ref[...]


# ------------------------------ python wrapper ---------------------------------
def mdeq_branch_interp_forward(params, y_list, *, num_groups=NUM_GROUPS, eps=GN_EPS,
                               roll_dirsign=-1, tap_dtype=jnp.float32):
    y0, y1 = y_list                                    # NCHW, like the PyTorch module
    n, c0, h, w = y0.shape
    _, c1, h1, w1 = y1.shape
    hw, h1w1 = h * w, h1 * w1
    nhw = n * hw
    ccat = c0 + c1
    cout = params['w2'].shape[0]

    # trace-time constants
    bt_blk = jnp.asarray(_bilinear_matrix_t_blockdiag(h, w, h1, w1, n))       # (n*h1w1, nhw) f32
    masks = jnp.asarray(_conv3x3_masks_stacked(h, w, n), dtype=tap_dtype)     # (8, nhw)
    gmean = jnp.asarray(_group_mean_matrix(ccat, num_groups))                 # (ccat, ccat) f32
    shifts = tuple(int((roll_dirsign * (dy * w + dx)) % nhw)
                   for dy in (-1, 0, 1) for dx in (-1, 0, 1))

    # parameters in the channels-first matrix layout used by the kernel
    w1m = params['w1'].reshape(ccat, ccat).astype(jnp.float32)
    w1a = w1m[:, :c0]                                                         # (ccat, c0)  f32
    w1b = w1m[:, c0:]                                                         # (ccat, c1)  f32
    b1 = params['b1'].reshape(ccat, 1).astype(jnp.float32)
    gamma = params['gamma'].reshape(ccat, 1).astype(jnp.float32)
    beta = params['beta'].reshape(ccat, 1).astype(jnp.float32)
    # (9, cout, ccat) bf16; tap index k = (dy+1)*3 + (dx+1) matches the kernel loop
    w2t = jnp.transpose(params['w2'], (2, 3, 0, 1)).reshape(
        9, cout, ccat).astype(jnp.bfloat16)
    b2 = params['b2'].reshape(cout, 1).astype(jnp.float32)

    # batch stacked along the lane axis: (C, N*HW)
    y0s = jnp.transpose(y0.reshape(n, c0, hw), (1, 0, 2)).reshape(
        c0, nhw).astype(jnp.float32)
    y1s = jnp.transpose(y1.reshape(n, c1, h1w1), (1, 0, 2)).reshape(
        c1, n * h1w1).astype(jnp.float32)

    kernel = functools.partial(_fused_kernel, num_samples=n, hw=hw, eps=eps,
                               shifts=shifts, tap_dtype=tap_dtype)
    out = pl.pallas_call(
        kernel,
        out_shape=jax.ShapeDtypeStruct((cout, nhw), jnp.float32),
    )(y0s, y1s, bt_blk, w1a, w1b, b1, gamma, beta, gmean, w2t, b2, masks)

    # back to NCHW like the reference
    return jnp.transpose(out.reshape(cout, n, hw), (1, 0, 2)).reshape(n, cout, h, w)


# ------------------------------ pure-JAX reference -----------------------------
def reference_forward(params, y_list, *, num_groups=NUM_GROUPS, eps=GN_EPS):
    y0 = y_list[0].astype(jnp.float32)
    n, _, h, w = y0.shape
    ups = [y0]
    for y in y_list[1:]:
        _, _, hi, wi = y.shape
        uh = jnp.asarray(_linear_interp_matrix(h, hi))
        uw = jnp.asarray(_linear_interp_matrix(w, wi))
        ups.append(jnp.einsum('Hh,Ww,nchw->ncHW', uh, uw, y.astype(jnp.float32)))
    x = jnp.concatenate(ups, axis=1)
    ccat = x.shape[1]
    z = jnp.einsum('oi,nihw->nohw', params['w1'].reshape(ccat, ccat), x)
    z = z + params['b1'][None, :, None, None]
    cpg = ccat // num_groups
    zg = z.reshape(n, num_groups, cpg, h, w)
    mean = jnp.mean(zg, axis=(2, 3, 4), keepdims=True)
    var = jnp.mean((zg - mean) ** 2, axis=(2, 3, 4), keepdims=True)
    zn = ((zg - mean) * lax.rsqrt(var + eps)).reshape(n, ccat, h, w)
    a = jnp.maximum(zn * params['gamma'][None, :, None, None]
                    + params['beta'][None, :, None, None], 0.0)
    o = lax.conv_general_dilated(a, params['w2'], window_strides=(1, 1),
                                 padding=((1, 1), (1, 1)),
                                 dimension_numbers=('NCHW', 'OIHW', 'NCHW'))
    return o + params['b2'][None, :, None, None]


# ------------------------------ parameter init ---------------------------------
def init_params(key, num_channels=NUM_CHANNELS, output_channels=OUTPUT_CHANNELS):
    """Mirrors MDEQBranchInterp._reset: conv weight/bias ~ N(0, 0.01); GN affine (1, 0)."""
    ccat = int(sum(num_channels))
    k1, k2, k3, k4 = jax.random.split(key, 4)
    return {
        'w1': 0.01 * jax.random.normal(k1, (ccat, ccat, 1, 1), jnp.float32),
        'b1': 0.01 * jax.random.normal(k2, (ccat,), jnp.float32),
        'gamma': jnp.ones((ccat,), jnp.float32),
        'beta': jnp.zeros((ccat,), jnp.float32),
        'w2': 0.01 * jax.random.normal(k3, (output_channels, ccat, 3, 3), jnp.float32),
        'b2': 0.01 * jax.random.normal(k4, (output_channels,), jnp.float32),
    }


# ------------------------------------ main --------------------------------------
if __name__ == "__main__":
    key = jax.random.PRNGKey(0)
    pkey, k0, k1 = jax.random.split(key, 3)
    params = init_params(pkey)

    # y_list: two MDEQ branches at different resolutions (NCHW, like PyTorch).
    y0 = jax.random.normal(k0, (2, NUM_CHANNELS[0], 16, 16), jnp.float32)
    y1 = jax.random.normal(k1, (2, NUM_CHANNELS[1], 8, 8), jnp.float32)

    tap_dtype, dirsign = _choose_tap_dtype_and_dirsign()
    fwd = jax.jit(functools.partial(mdeq_branch_interp_forward,
                                    roll_dirsign=dirsign, tap_dtype=tap_dtype))
    out = jax.block_until_ready(fwd(params, (y0, y1)))

    assert out.shape == (2, OUTPUT_CHANNELS, 16, 16)
    assert bool(jnp.all(jnp.isfinite(out)))

    ref = reference_forward(params, (y0, y1))
    err = float(jnp.max(jnp.abs(out - ref)))
    assert err < 1e-2, f"pallas output mismatch vs reference (max abs err {err})"

    print("KERNEL_OK")
</pallas_src>

<mosaic_0001>
module attributes {stable_mosaic.version = 11 : i64} {
  func.func @kernel(%arg0: memref<8x256xf32, #tpu.memory_space<vmem>>, %arg1: memref<8x256xf32, #tpu.memory_space<vmem>>) attributes {dimension_semantics = [], scalar_prefetch = 0 : i64, scratch_operands = 0 : i64, tpu.core_type = #tpu.core_type<tc>} {
    %c0 = arith.constant 0 : index
    %c0_0 = arith.constant 0 : index
    %0 = vector.load %arg0[%c0, %c0_0] : memref<8x256xf32, #tpu.memory_space<vmem>>, vector<8x256xf32>
    %c1_i32 = arith.constant 1 : i32
    %1 = tpu.dynamic_rotate %0 by %c1_i32 dim 1 : vector<8x256xf32>, i32 -> vector<8x256xf32>
    %c0_1 = arith.constant 0 : index
    %c0_2 = arith.constant 0 : index
    %2 = vector.load %arg1[%c0_1, %c0_2] : memref<8x256xf32, #tpu.memory_space<vmem>>, vector<8x256xf32>
    tpu.vector_store %arg1[%c0_1, %c0_2], %1 {strides = array<i32>} : memref<8x256xf32, #tpu.memory_space<vmem>>, vector<8x256xf32>,
    return
  }
}

</mosaic_0001>

<llo_original>
// kernel: tpu_custom_call.1
$region0: #{tpu_custom_call.1}
  #allocation0 [shape = 'u32[]', space=smem, size = 0x4, offset = 0x4, fixed_abs, tag = 'smem constant byte address 0x4 - core index']
  #allocation1 [shape = 'u32[144,128]{1,0:T(1,128)}', space=vmem, size = 0x12000, scoped, tag = 'internal scratch']
  %s0 = inlined_call_operand.hbm [shape: f32[8,256], index: 0, kind: input, shape index: {}]
  %s1 = inlined_call_operand.hbm [shape: f32[8,256], index: 1, kind: output, shape index: {}]
  %s2 = sld [smem:[#allocation0]]
  $region18: #{tpu_custom_call.1} parent=0
    _
  %s4 = ssub.s32 1, %s2
  %s5 = scalar_select 0, %s4, %s2
  $region1: #{tpu_custom_call.1} parent=0
    #allocation2 [shape = 'u8[8192]{0}', space=vmem, size = 0x2000, scoped, tag = 'input window, operand 0, single buffered']
    #allocation3 [shape = 's32[1]{0}', space=sflag, size = 0x4, scoped, tag = 'scoped memory for tpu_custom_call.1']
    #allocation4 [shape = 's32[1]{0}', space=sflag, size = 0x4, scoped, tag = 'scoped memory for tpu_custom_call.1']
    #allocation5 [shape = 'u8[8192]{0}', space=vmem, size = 0x2000, scoped, tag = 'output window, operand 0, single buffered']
    %6 = vsyncpa [#allocation3], 0
    %7 = vsyncpa [#allocation4], 0
    // Predicated region
    $region2: #{tpu_custom_call.1} parent=1 // pred_check
      _
    $region3: #{tpu_custom_call.1} parent=1 // pred_check_branch
      %9 = sbr.rel (0) target = $region5
    $region4: #{tpu_custom_call.1} parent=1 // pred_region
      %s11 = ssub.s32 256, 256
      %12 = vsyncadd [#allocation3], %s11
      %s14 = sshll.u32 [#allocation2], 4
      %s15 = int_to_ptr.vmem [resolvable:$true] %s14
      %17 = dma.hbm_to_vmem [thread:$0]  %s0, 256, %s15, [#allocation3]
    $region5: #{tpu_custom_call.1} parent=1 // pred_fallthru
      _
    // Predicated region
    $region6: #{tpu_custom_call.1} parent=1 // pred_check
      _
    $region7: #{tpu_custom_call.1} parent=1 // pred_check_branch
      %19 = sbr.rel (0) target = $region9
    $region8: #{tpu_custom_call.1} parent=1 // pred_region
      %20 = dma.done [#allocation3], 256
    $region9: #{tpu_custom_call.1} parent=1 // pred_fallthru
      _
    %v21 = vld [vmem:[#allocation2] sm:$0xff]
    %v22 = vld [vmem:[#allocation2 + $0x8] sm:$0xff]
    %23 = vrot.lane.b32.xlu0 %v21, 1
    %v24 = vpop.permute.xlu0 %23
    %25 = vrot.lane.b32.xlu0 %v22, 1
    %v26 = vpop.permute.xlu0 %25
    %v27 = vlaneseq
    %v28 = vand.u32 %v27, 127
    %vm29 = vcmp.lt.s32.totalorder %v28, 1
    %v30 = vsel %vm29, %v24, %v26
    %v31 = vsel %vm29, %v26, %v24
    %32 = vst [vmem:[#allocation5] sm:$0xff] %v31
    %33 = vst [vmem:[#allocation5 + $0x8] sm:$0xff] %v30
    // Predicated region
    $region10: #{tpu_custom_call.1} parent=1 // pred_check
      _
    $region11: #{tpu_custom_call.1} parent=1 // pred_check_branch
      %35 = sbr.rel (0) target = $region13
    $region12: #{tpu_custom_call.1} parent=1 // pred_region
      %s37 = ssub.s32 256, 256
      %38 = vsyncadd [#allocation4], %s37
      %s40 = sshll.u32 [#allocation5], 4
      %s41 = int_to_ptr.vmem [resolvable:$true] %s40
      %43 = dma.vmem_to_hbm [thread:$0]  %s41, 256, %s1, [#allocation4]
    $region13: #{tpu_custom_call.1} parent=1 // pred_fallthru
      _
    // Predicated region
    $region14: #{tpu_custom_call.1} parent=1 // pred_check
      _
    $region15: #{tpu_custom_call.1} parent=1 // pred_check_branch
      %45 = sbr.rel (0) target = $region17
    $region16: #{tpu_custom_call.1} parent=1 // pred_region
      %46 = dma.done [#allocation4], 256
    $region17: #{tpu_custom_call.1} parent=1 // pred_fallthru
      _
    %47 = vsyncpa [#allocation3], 1
    %48 = vsyncpa [#allocation4], 1

</llo_original>
